<compile_context>
chip_gen: v6e
topology: v6e:2x2x1
jax: 0.10.0
libtpu: 0.0.40
codegen_flags: <defaults>
</compile_context>

<pallas_src>
import functools

import jax
import jax.numpy as jnp
from jax.experimental import pallas as pl
from jax.experimental.pallas import tpu as pltpu

BN_EPS = 1e-5
VMEM_LIMIT_BYTES = 48 * 1024 * 1024  # safe on v5e/v6e (128 MiB) and v7x (64 MiB)


# ----------------------------- Pallas kernels ------------------------------ #

def _mm_bn_kernel(x_ref, w_ref, scale_ref, bias_ref, o_ref, acc_ref, *,
                  apply_relu):
    """out = relu?((X @ W) * scale + bias), K-tiled with f32 accumulator."""
    k = pl.program_id(1)

    @pl.when(k == 0)
    def _():
        acc_ref[...] = jnp.zeros_like(acc_ref)

    acc_ref[...] += jnp.dot(x_ref[...], w_ref[...],
                            preferred_element_type=jnp.float32)

    @pl.when(k == pl.num_programs(1) - 1)
    def _():
        out = acc_ref[...] * scale_ref[...] + bias_ref[...]
        if apply_relu:
            out = jnp.maximum(out, 0.0)
        o_ref[...] = out.astype(o_ref.dtype)


def _mm_bn_add_relu_kernel(x_ref, w_ref, scale_ref, bias_ref, r_ref, o_ref,
                           acc_ref):
    """out = relu((X @ W) * scale + bias + residual)  (identity shortcut)."""
    k = pl.program_id(1)

    @pl.when(k == 0)
    def _():
        acc_ref[...] = jnp.zeros_like(acc_ref)

    acc_ref[...] += jnp.dot(x_ref[...], w_ref[...],
                            preferred_element_type=jnp.float32)

    @pl.when(k == pl.num_programs(1) - 1)
    def _():
        out = (acc_ref[...] * scale_ref[...] + bias_ref[...]
               + r_ref[...].astype(jnp.float32))
        o_ref[...] = jnp.maximum(out, 0.0).astype(o_ref.dtype)


def _mm_bn_proj_add_relu_kernel(x_ref, w_ref, scale_ref, bias_ref,
                                r_ref, rw_ref, rscale_ref, o_ref, acc_ref):
    """out = relu((X @ W)*scale + bias + (R @ Wsc)*rscale)   (fused 1x1-conv
    projection shortcut; its folded BN bias is pre-added into `bias`)."""
    k = pl.program_id(1)

    @pl.when(k == 0)
    def _():
        acc_ref[...] = jnp.zeros_like(acc_ref)

    acc_ref[...] += jnp.dot(x_ref[...], w_ref[...],
                            preferred_element_type=jnp.float32)

    @pl.when(k == pl.num_programs(1) - 1)
    def _():
        sc = jnp.dot(r_ref[...], rw_ref[...],
                     preferred_element_type=jnp.float32)
        out = (acc_ref[...] * scale_ref[...] + bias_ref[...]
               + sc * rscale_ref[...])
        o_ref[...] = jnp.maximum(out, 0.0).astype(o_ref.dtype)


# ------------------------------ tiling helpers ------------------------------ #

def _round_up(x, m):
    return (x + m - 1) // m * m


def _choose_tm(M):
    """Largest row tile that keeps VMEM bounded; >= 2 tiles when possible so a
    'parallel' grid axis can split across the two TensorCores on v7x."""
    if M >= 1024:
        return 512
    if M >= 16:
        return _round_up((M + 1) // 2, 8)
    return _round_up(M, 8)


def _choose_tk(Kpad):
    """K tile: multiple of 128 dividing Kpad, as large as possible <= 1536."""
    if Kpad <= 1536:
        return Kpad
    for cand in range(1536, 127, -128):
        if Kpad % cand == 0:
            return cand
    return 128  # unreachable: 128 always divides Kpad


def _pad2d(a, rows, cols):
    r, c = a.shape
    if r == rows and c == cols:
        return a
    return jnp.pad(a, ((0, rows - r), (0, cols - c)))


# ------------------------- fused matmul+BN wrapper -------------------------- #

def _fused_matmul_bn(x2d, w2d, scale, bias, *, apply_relu, out_dtype,
                     residual=None, res_w=None, res_scale=None):
    """relu?( (x2d @ w2d)*scale + bias (+ residual | + (residual@res_w)*res_scale) )

    Operands are cast to bf16 (f32 accumulation / epilogue), M/K/N are padded
    so all tiles are (8,128)-aligned and the output is lane-dense.
    """
    M, K = x2d.shape
    N = w2d.shape[1]
    Npad = _round_up(N, 128)
    Kpad = _round_up(K, 128)
    tm = _choose_tm(M)
    Mpad = _round_up(M, tm)
    tk = _choose_tk(Kpad)
    grid = (Mpad // tm, Kpad // tk)

    xb = _pad2d(x2d.astype(jnp.bfloat16), Mpad, Kpad)
    wb = _pad2d(w2d.astype(jnp.bfloat16), Kpad, Npad)
    sb = _pad2d(scale.reshape(1, N).astype(jnp.float32), 1, Npad)
    bb = _pad2d(bias.reshape(1, N).astype(jnp.float32), 1, Npad)

    x_spec = pl.BlockSpec((tm, tk), lambda i, k: (i, k))
    w_spec = pl.BlockSpec((tk, Npad), lambda i, k: (k, 0))
    v_spec = pl.BlockSpec((1, Npad), lambda i, k: (0, 0))
    o_spec = pl.BlockSpec((tm, Npad), lambda i, k: (i, 0))
    out_shape = jax.ShapeDtypeStruct((Mpad, Npad), out_dtype)
    scratch = [pltpu.VMEM((tm, Npad), jnp.float32)]
    cparams = pltpu.CompilerParams(
        dimension_semantics=("parallel", "arbitrary"),
        vmem_limit_bytes=VMEM_LIMIT_BYTES)

    if residual is None:
        out = pl.pallas_call(
            functools.partial(_mm_bn_kernel, apply_relu=apply_relu),
            out_shape=out_shape,
            grid=grid,
            in_specs=[x_spec, w_spec, v_spec, v_spec],
            out_specs=o_spec,
            scratch_shapes=scratch,
            compiler_params=cparams,
        )(xb, wb, sb, bb)
    elif res_w is None:
        # identity shortcut: residual is (M, N)
        rb = _pad2d(residual.astype(jnp.bfloat16), Mpad, Npad)
        r_spec = pl.BlockSpec((tm, Npad), lambda i, k: (i, 0))
        out = pl.pallas_call(
            _mm_bn_add_relu_kernel,
            out_shape=out_shape,
            grid=grid,
            in_specs=[x_spec, w_spec, v_spec, v_spec, r_spec],
            out_specs=o_spec,
            scratch_shapes=scratch,
            compiler_params=cparams,
        )(xb, wb, sb, bb, rb)
    else:
        # projection shortcut fused into the epilogue: residual (M, Kr)
        Kr = res_w.shape[0]
        Krpad = _round_up(Kr, 128)
        rb = _pad2d(residual.astype(jnp.bfloat16), Mpad, Krpad)
        rwb = _pad2d(res_w.astype(jnp.bfloat16), Krpad, Npad)
        rsb = _pad2d(res_scale.reshape(1, N).astype(jnp.float32), 1, Npad)
        r_spec = pl.BlockSpec((tm, Krpad), lambda i, k: (i, 0))
        rw_spec = pl.BlockSpec((Krpad, Npad), lambda i, k: (0, 0))
        out = pl.pallas_call(
            _mm_bn_proj_add_relu_kernel,
            out_shape=out_shape,
            grid=grid,
            in_specs=[x_spec, w_spec, v_spec, v_spec, r_spec, rw_spec, v_spec],
            out_specs=o_spec,
            scratch_shapes=scratch,
            compiler_params=cparams,
        )(xb, wb, sb, bb, rb, rwb, rsb)

    return out[:M, :N]


# ------------------------------- JAX glue ---------------------------------- #

def _im2col(x_nhwc, ksize, stride, pad):
    """x: (B, H, W, C) -> (B*Ho*Wo, ksize*ksize*C), feature order (kh, kw, c)."""
    x = jnp.pad(x_nhwc, ((0, 0), (pad, pad), (pad, pad), (0, 0)))
    B, Hp, Wp, C = x.shape
    Ho = (Hp - ksize) // stride + 1
    Wo = (Wp - ksize) // stride + 1
    patches = []
    for kh in range(ksize):
        for kw in range(ksize):
            patches.append(
                x[:, kh:kh + Ho * stride:stride, kw:kw + Wo * stride:stride, :])
    cols = jnp.concatenate(patches, axis=-1)          # (B, Ho, Wo, k*k*C)
    return cols.reshape(B * Ho * Wo, ksize * ksize * C), Ho, Wo


def _fold_bn(bn):
    scale = bn["gamma"] * jax.lax.rsqrt(bn["var"] + BN_EPS)
    bias = bn["beta"] - bn["mean"] * scale
    return scale, bias


def _w_to_matmul(w_oihw):
    """(Cout, Cin, kh, kw) -> (kh*kw*Cin, Cout), matching _im2col ordering."""
    cout = w_oihw.shape[0]
    return jnp.transpose(w_oihw, (2, 3, 1, 0)).reshape(-1, cout)


def basic_block_forward(x_nchw, params, stride):
    """Forward of BasicBlock; input/output are NCHW (input dtype preserved)."""
    # TODO(synk): keep activations NHWC/bf16 (and channel-padded) across a full
    # ResNet stack to drop the per-block NCHW<->NHWC transposes.
    x = jnp.transpose(x_nchw, (0, 2, 3, 1)).astype(jnp.bfloat16)   # NHWC bf16
    B, H, W, Cin = x.shape
    planes = params["conv1_w"].shape[0]

    # conv1 (3x3, stride) + bn1 + relu  -> bf16 intermediate
    cols1, Ho, Wo = _im2col(x, 3, stride, 1)
    s1, b1 = _fold_bn(params["bn1"])
    out1 = _fused_matmul_bn(cols1, _w_to_matmul(params["conv1_w"]), s1, b1,
                            apply_relu=True, out_dtype=jnp.bfloat16)
    out1_img = out1.reshape(B, Ho, Wo, planes)

    # conv2 (3x3, stride 1) + bn2 + shortcut + relu, all fused in one kernel.
    cols2, _, _ = _im2col(out1_img, 3, 1, 1)
    s2, b2 = _fold_bn(params["bn2"])
    w2 = _w_to_matmul(params["conv2_w"])

    if stride != 1 or Cin != planes:
        # projection shortcut (1x1 conv stride s + BN), fused into conv2 epilogue
        xs = x[:, ::stride, ::stride, :].reshape(-1, Cin)
        ss, bs = _fold_bn(params["sc_bn"])
        wsc = _w_to_matmul(params["sc_w"])
        out = _fused_matmul_bn(cols2, w2, s2, b2 + bs,
                               apply_relu=True, out_dtype=jnp.float32,
                               residual=xs, res_w=wsc, res_scale=ss)
    else:
        shortcut = x.reshape(-1, Cin)
        out = _fused_matmul_bn(cols2, w2, s2, b2,
                               apply_relu=True, out_dtype=jnp.float32,
                               residual=shortcut)

    out = out.reshape(B, Ho, Wo, planes)
    return jnp.transpose(out, (0, 3, 1, 2)).astype(x_nchw.dtype)


# ------------------------- pure-JAX reference check ------------------------ #

def _ref_conv(x_nchw, w, stride, pad):
    return jax.lax.conv_general_dilated(
        x_nchw, w, (stride, stride), ((pad, pad), (pad, pad)),
        dimension_numbers=("NCHW", "OIHW", "NCHW"))


def _ref_bn(x_nchw, bn):
    s = (bn["gamma"] * jax.lax.rsqrt(bn["var"] + BN_EPS))[None, :, None, None]
    b = (bn["beta"] - bn["mean"] * bn["gamma"]
         * jax.lax.rsqrt(bn["var"] + BN_EPS))[None, :, None, None]
    return x_nchw * s + b


def basic_block_reference(x, params, stride):
    out = jax.nn.relu(_ref_bn(_ref_conv(x, params["conv1_w"], stride, 1),
                              params["bn1"]))
    out = _ref_bn(_ref_conv(out, params["conv2_w"], 1, 1), params["bn2"])
    cin, planes = x.shape[1], params["conv1_w"].shape[0]
    if stride != 1 or cin != planes:
        sc = _ref_bn(_ref_conv(x, params["sc_w"], stride, 0), params["sc_bn"])
    else:
        sc = x
    return jax.nn.relu(out + sc)


# ---------------------------------- main ----------------------------------- #

def _make_bn(key, c):
    k1, k2, k3, k4 = jax.random.split(key, 4)
    return {
        "gamma": 1.0 + 0.1 * jax.random.normal(k1, (c,), jnp.float32),
        "beta": 0.1 * jax.random.normal(k2, (c,), jnp.float32),
        "mean": 0.1 * jax.random.normal(k3, (c,), jnp.float32),
        "var": 0.5 + jnp.abs(jax.random.normal(k4, (c,), jnp.float32)),
    }


if __name__ == "__main__":
    key = jax.random.PRNGKey(0)
    keys = jax.random.split(key, 16)

    # --- test 1: projection-shortcut path (stride 2, Cin != planes) --------- #
    B, Cin, H, W = 2, 4, 16, 16
    planes, stride = 8, 2
    x = jax.random.normal(keys[0], (B, Cin, H, W), jnp.float32)
    params = {
        "conv1_w": 0.2 * jax.random.normal(keys[1], (planes, Cin, 3, 3), jnp.float32),
        "bn1": _make_bn(keys[2], planes),
        "conv2_w": 0.2 * jax.random.normal(keys[3], (planes, planes, 3, 3), jnp.float32),
        "bn2": _make_bn(keys[4], planes),
        "sc_w": 0.2 * jax.random.normal(keys[5], (planes, Cin, 1, 1), jnp.float32),
        "sc_bn": _make_bn(keys[6], planes),
    }
    out = jax.block_until_ready(basic_block_forward(x, params, stride))
    ref = jax.block_until_ready(basic_block_reference(x, params, stride))
    assert out.shape == (B, planes, H // stride, W // stride), out.shape
    # bf16 matmul operands (f32 accumulation) -> relaxed tolerance vs f32 ref.
    assert jnp.allclose(out, ref, rtol=5e-2, atol=1e-1), float(
        jnp.max(jnp.abs(out - ref)))

    # --- test 2: identity-shortcut path (stride 1, Cin == planes) ----------- #
    B2, Cin2, H2, W2 = 2, 8, 16, 16
    planes2, stride2 = 8, 1
    x2 = jax.random.normal(keys[7], (B2, Cin2, H2, W2), jnp.float32)
    params2 = {
        "conv1_w": 0.2 * jax.random.normal(keys[8], (planes2, Cin2, 3, 3), jnp.float32),
        "bn1": _make_bn(keys[9], planes2),
        "conv2_w": 0.2 * jax.random.normal(keys[10], (planes2, planes2, 3, 3), jnp.float32),
        "bn2": _make_bn(keys[11], planes2),
    }
    out2 = jax.block_until_ready(basic_block_forward(x2, params2, stride2))
    ref2 = jax.block_until_ready(basic_block_reference(x2, params2, stride2))
    assert out2.shape == (B2, planes2, H2, W2), out2.shape
    assert jnp.allclose(out2, ref2, rtol=5e-2, atol=1e-1), float(
        jnp.max(jnp.abs(out2 - ref2)))

    print("KERNEL_OK")
</pallas_src>

<mosaic_0001>
module attributes {stable_mosaic.version = 11 : i64} {
  func.func @_mm_bn_kernel(%arg0: i32, %arg1: i32, %arg2: memref<64x128xbf16, #tpu.memory_space<vmem>>, %arg3: memref<128x128xbf16, #tpu.memory_space<vmem>>, %arg4: memref<1x128xf32, #tpu.memory_space<vmem>>, %arg5: memref<1x128xf32, #tpu.memory_space<vmem>>, %arg6: memref<64x128xbf16, #tpu.memory_space<vmem>>, %arg7: memref<64x128xf32, #tpu.memory_space<vmem>>) attributes {dimension_semantics = [#tpu.dimension_semantics<parallel>, #tpu.dimension_semantics<arbitrary>], iteration_bounds = array<i64: 2, 1>, scalar_prefetch = 0 : i64, scratch_operands = 1 : i64, tpu.core_type = #tpu.core_type<tc>, window_params = [{transform_indices = @transform_0, window_bounds = array<i64: 64, 128>}, {transform_indices = @transform_1, window_bounds = array<i64: 128, 128>}, {pipeline_mode = #tpu.pipeline_mode<synchronous>, transform_indices = @transform_2, window_bounds = array<i64: 1, 128>}, {pipeline_mode = #tpu.pipeline_mode<synchronous>, transform_indices = @transform_3, window_bounds = array<i64: 1, 128>}, {transform_indices = @transform_4, window_bounds = array<i64: 64, 128>}]} {
    %c0_i32 = arith.constant 0 : i32
    %0 = arith.cmpi eq, %arg1, %c0_i32 : i32
    %1 = arith.extui %0 : i1 to i32
    %c0_i32_0 = arith.constant 0 : i32
    %2 = arith.cmpi ne, %1, %c0_i32_0 : i32
    scf.if %2 {
      %cst_10 = arith.constant 0.000000e+00 : f32
      %12 = vector.broadcast %cst_10 : f32 to vector<64x128xf32>
      %c0_11 = arith.constant 0 : index
      %c0_12 = arith.constant 0 : index
      %13 = vector.load %arg7[%c0_11, %c0_12] : memref<64x128xf32, #tpu.memory_space<vmem>>, vector<64x128xf32>
      tpu.vector_store %arg7[%c0_11, %c0_12], %12 {strides = array<i32>} : memref<64x128xf32, #tpu.memory_space<vmem>>, vector<64x128xf32>,
    } else {
    }
    %c0 = arith.constant 0 : index
    %c0_1 = arith.constant 0 : index
    %3 = vector.load %arg7[%c0, %c0_1] : memref<64x128xf32, #tpu.memory_space<vmem>>, vector<64x128xf32>
    %c0_2 = arith.constant 0 : index
    %c0_3 = arith.constant 0 : index
    %4 = vector.load %arg2[%c0_2, %c0_3] : memref<64x128xbf16, #tpu.memory_space<vmem>>, vector<64x128xbf16>
    %c0_4 = arith.constant 0 : index
    %c0_5 = arith.constant 0 : index
    %5 = vector.load %arg3[%c0_4, %c0_5] : memref<128x128xbf16, #tpu.memory_space<vmem>>, vector<128x128xbf16>
    %cst = arith.constant dense<0.000000e+00> : vector<64x128xf32>
    %6 = tpu.matmul %4, %5, %cst {dimension_numbers = #tpu.dot_dimension_numbers<[1], [0], [0], [1], [0, 0, 1, 1], [], []>} : vector<64x128xbf16>, vector<128x128xbf16>, vector<64x128xf32> -> vector<64x128xf32>
    %7 = arith.addf %3, %6 : vector<64x128xf32>
    %c0_6 = arith.constant 0 : index
    %c0_7 = arith.constant 0 : index
    %8 = vector.load %arg7[%c0_6, %c0_7] : memref<64x128xf32, #tpu.memory_space<vmem>>, vector<64x128xf32>
    tpu.vector_store %arg7[%c0_6, %c0_7], %7 {strides = array<i32>} : memref<64x128xf32, #tpu.memory_space<vmem>>, vector<64x128xf32>,
    %c0_i32_8 = arith.constant 0 : i32
    %9 = arith.cmpi eq, %arg1, %c0_i32_8 : i32
    %10 = arith.extui %9 : i1 to i32
    %c0_i32_9 = arith.constant 0 : i32
    %11 = arith.cmpi ne, %10, %c0_i32_9 : i32
    scf.if %11 {
      %c0_10 = arith.constant 0 : index
      %c0_11 = arith.constant 0 : index
      %12 = vector.load %arg7[%c0_10, %c0_11] : memref<64x128xf32, #tpu.memory_space<vmem>>, vector<64x128xf32>
      %c0_12 = arith.constant 0 : index
      %c0_13 = arith.constant 0 : index
      %13 = vector.load %arg4[%c0_12, %c0_13] : memref<1x128xf32, #tpu.memory_space<vmem>>, vector<1x128xf32>
      %14 = vector.broadcast %13 : vector<1x128xf32> to vector<64x128xf32>
      %15 = arith.mulf %12, %14 : vector<64x128xf32>
      %c0_14 = arith.constant 0 : index
      %c0_15 = arith.constant 0 : index
      %16 = vector.load %arg5[%c0_14, %c0_15] : memref<1x128xf32, #tpu.memory_space<vmem>>, vector<1x128xf32>
      %17 = vector.broadcast %16 : vector<1x128xf32> to vector<64x128xf32>
      %18 = arith.addf %15, %17 : vector<64x128xf32>
      %cst_16 = arith.constant 0.000000e+00 : f32
      %19 = vector.broadcast %cst_16 : f32 to vector<64x128xf32>
      %20 = arith.maximumf %18, %19 : vector<64x128xf32>
      %21 = arith.truncf %20 : vector<64x128xf32> to vector<64x128xbf16>
      %c0_17 = arith.constant 0 : index
      %c0_18 = arith.constant 0 : index
      %22 = vector.load %arg6[%c0_17, %c0_18] : memref<64x128xbf16, #tpu.memory_space<vmem>>, vector<64x128xbf16>
      tpu.vector_store %arg6[%c0_17, %c0_18], %21 {strides = array<i32>} : memref<64x128xbf16, #tpu.memory_space<vmem>>, vector<64x128xbf16>,
    } else {
    }
    return
  }
  func.func @transform_0(%arg0: i32, %arg1: i32) -> (i32, i32) {
    %c0_i32 = arith.constant 0 : i32
    return %arg0, %arg1 : i32, i32
  }
  func.func @transform_1(%arg0: i32, %arg1: i32) -> (i32, i32) {
    %c0_i32 = arith.constant 0 : i32
    %c0_i32_0 = arith.constant 0 : i32
    return %arg1, %c0_i32 : i32, i32
  }
  func.func @transform_2(%arg0: i32, %arg1: i32) -> (i32, i32) {
    %c0_i32 = arith.constant 0 : i32
    %c0_i32_0 = arith.constant 0 : i32
    %c0_i32_1 = arith.constant 0 : i32
    return %c0_i32, %c0_i32_0 : i32, i32
  }
  func.func @transform_3(%arg0: i32, %arg1: i32) -> (i32, i32) {
    %c0_i32 = arith.constant 0 : i32
    %c0_i32_0 = arith.constant 0 : i32
    %c0_i32_1 = arith.constant 0 : i32
    return %c0_i32, %c0_i32_0 : i32, i32
  }
  func.func @transform_4(%arg0: i32, %arg1: i32) -> (i32, i32) {
    %c0_i32 = arith.constant 0 : i32
    %c0_i32_0 = arith.constant 0 : i32
    return %arg0, %c0_i32 : i32, i32
  }
}

</mosaic_0001>

<llo_original>
// kernel: tpu_custom_call.1
$region0: #{tpu_custom_call.1}
  #allocation0 [shape = 'u32[]', space=smem, size = 0x4, offset = 0x4, fixed_abs, tag = 'smem constant byte address 0x4 - core index']
  #allocation1 [shape = 'u32[144,128]{1,0:T(1,128)}', space=vmem, size = 0x12000, scoped, tag = 'internal scratch']
  #allocation2 [shape = 'f32[64,128]{1,0:T(8,128)}', space=vmem, size = 0x8000, scoped, tag = 'scratch operand']
  %s0 = inlined_call_operand.hbm [shape: bf16[128,128], index: 0, kind: input, shape index: {}]
  %s1 = inlined_call_operand.hbm [shape: bf16[128,128], index: 1, kind: input, shape index: {}]
  %s2 = inlined_call_operand.vmem [shape: f32[1,128], index: 2, kind: input, shape index: {}]
  %s3 = inlined_call_operand.vmem [shape: f32[1,128], index: 3, kind: input, shape index: {}]
  %s4 = inlined_call_operand.hbm [shape: bf16[128,128], index: 4, kind: output, shape index: {}]
  %s5 = sld [smem:[#allocation0]]
  $region65: #{tpu_custom_call.1} parent=0
    _
  %s7 = ssub.s32 1, %s5
  %s8 = scalar_select 0, %s7, %s5
  $region1: #{tpu_custom_call.1} parent=0
    #allocation3 [shape = 'u8[32768]{0}', space=vmem, size = 0x8000, scoped, tag = 'input window, operand 0']
    #allocation4 [shape = 's32[2]{0}', space=sflag, size = 0x8, scoped, tag = 'scoped memory for tpu_custom_call.1']
    #allocation5 [shape = 's32[2]{0}', space=sflag, size = 0x8, scoped, tag = 'scoped memory for tpu_custom_call.1']
    #allocation6 [shape = 'u8[32768]{0}', space=vmem, size = 0x8000, scoped, tag = 'input window, operand 1, single buffered']
    #allocation7 [shape = 's32[1]{0}', space=sflag, size = 0x4, scoped, tag = 'scoped memory for tpu_custom_call.1']
    #allocation8 [shape = 'u8[32768]{0}', space=vmem, size = 0x8000, scoped, tag = 'output window, operand 0']
    %9 = vsyncpa [#allocation4], 0
    %s10 = scalar_lea.sflag [#allocation4], 1
    %11 = vsyncpa %s10, 0
    %12 = vsyncpa [#allocation7], 0
    %13 = vsyncpa [#allocation5], 0
    %s14 = scalar_lea.sflag [#allocation5], 1
    %15 = vsyncpa %s14, 0
    loop: start=0, step=1, limit=4
    $region2: #{tpu_custom_call.1} parent=1 // loop_pre_header
      _
    $region3: #{tpu_custom_call.1} parent=1 // loop_header
      %s17 = sphi 0, %s21
      %p18 = scmp.ge.s32.totalorder %s17, 4
      %s24 = sphi 0, %s36
      %s25 = sphi 0, %s32
      %s26 = sphi 0, %s24
      %s27 = sphi 0, %s25
      %s28 = sphi 0, %s26
      %s29 = sphi 0, %s27
      %s41 = sphi 0, %s43
      %s44 = sphi 0, %s41
      %s45 = sphi 0, %s44
      %s61 = sphi 0, %s45
      %s67 = sphi 0, %s69
      %s70 = sphi 0, %s67
      %s71 = sphi 0, %s70
      %s87 = sphi 0, %s71
      %s91 = sphi 0, %s91
      %s93 = sphi 0, %s91
      %s94 = sphi 0, %s93
      %s108 = sphi 0, %s94
      %s112 = sphi 0, %s112
      %s114 = sphi 0, %s112
      %s115 = sphi 0, %s114
      %s129 = sphi 0, %s115
      %s135 = sphi 0, %s137
      %s138 = sphi 0, %s135
      %s139 = sphi 0, %s138
      %s155 = sphi 0, %s139
    $region4: #{tpu_custom_call.1} parent=1 // loop_header_branch
      %20 = sbr.rel (%p18) target = $region8
    $region5: #{tpu_custom_call.1} parent=1 // loop_body
      %s22 = ssub.s32 %s17, 1
      %s23 = ssub.s32 %s17, 2
      %s30 = sadd.s32 1, %s25
      %p31 = scmp.ge.s32.totalorder %s30, 1
      %s32 = scalar_select %p31, 0, %s30
      %s33 = sadd.s32 1, %s24
      %s34 = scalar_select %p31, %s33, %s24
      %p35 = scmp.ge.s32.totalorder %s34, 2
      %s36 = scalar_select %p35, 0, %s34
      %s37 = ssub.s32 %s24, %s36
      %s38 = ssub.s32 %s25, %s32
      %s39 = sor.u32 %s37, %s38
      %p40 = scmp.eq.s32.totalorder %s39, 0
      %s42 = sadd.s32 %s41, 1
      %s43 = scalar_select %p40, %s41, %s42
      %p46 = pneg %p40
      %p47 = scmp.eq.s32.totalorder %s17, 1
      %p48 = por %p46, %p47
      %p49 = scmp.ne.s32.totalorder %s41, %s44
      %p50 = scmp.eq.s32.totalorder %s17, 0
      %p51 = por %p49, %p50
      %p52 = scmp.ne.s32.totalorder %s41, %s44
      %p53 = scmp.eq.s32.totalorder %s22, 1
      %p54 = por %p52, %p53
      %p55 = scmp.ne.s32.totalorder %s44, %s45
      %p56 = scmp.eq.s32.totalorder %s22, 0
      %p57 = por %p55, %p56
      %p58 = scmp.ne.s32.totalorder %s44, %s45
      %p59 = scmp.eq.s32.totalorder %s23, 1
      %p60 = por %p58, %p59
      %p62 = scmp.ne.s32.totalorder %s45, %s61
      %p63 = scmp.eq.s32.totalorder %s23, 0
      %p64 = por %p62, %p63
      %s65 = ssub.s32 %s25, %s32
      %p66 = scmp.eq.s32.totalorder %s65, 0
      %s68 = sadd.s32 %s67, 1
      %s69 = scalar_select %p66, %s67, %s68
      %p72 = pneg %p66
      %p73 = scmp.eq.s32.totalorder %s17, 1
      %p74 = por %p72, %p73
      %p75 = scmp.ne.s32.totalorder %s67, %s70
      %p76 = scmp.eq.s32.totalorder %s17, 0
      %p77 = por %p75, %p76
      %p78 = scmp.ne.s32.totalorder %s67, %s70
      %p79 = scmp.eq.s32.totalorder %s22, 1
      %p80 = por %p78, %p79
      %p81 = scmp.ne.s32.totalorder %s70, %s71
      %p82 = scmp.eq.s32.totalorder %s22, 0
      %p83 = por %p81, %p82
      %p84 = scmp.ne.s32.totalorder %s70, %s71
      %p85 = scmp.eq.s32.totalorder %s23, 1
      %p86 = por %p84, %p85
      %p88 = scmp.ne.s32.totalorder %s71, %s87
      %p89 = scmp.eq.s32.totalorder %s23, 0
      %p90 = por %p88, %p89
      %s92 = sadd.s32 %s91, 1
      %p95 = scmp.eq.s32.totalorder %s17, 1
      %p96 = scmp.ne.s32.totalorder %s91, %s93
      %p97 = scmp.eq.s32.totalorder %s17, 0
      %p98 = por %p96, %p97
      %p99 = scmp.ne.s32.totalorder %s91, %s93
      %p100 = scmp.eq.s32.totalorder %s22, 1
      %p101 = por %p99, %p100
      %p102 = scmp.ne.s32.totalorder %s93, %s94
      %p103 = scmp.eq.s32.totalorder %s22, 0
      %p104 = por %p102, %p103
      %p105 = scmp.ne.s32.totalorder %s93, %s94
      %p106 = scmp.eq.s32.totalorder %s23, 1
      %p107 = por %p105, %p106
      %p109 = scmp.ne.s32.totalorder %s94, %s108
      %p110 = scmp.eq.s32.totalorder %s23, 0
      %p111 = por %p109, %p110
      %s113 = sadd.s32 %s112, 1
      %p116 = scmp.eq.s32.totalorder %s17, 1
      %p117 = scmp.ne.s32.totalorder %s112, %s114
      %p118 = scmp.eq.s32.totalorder %s17, 0
      %p119 = por %p117, %p118
      %p120 = scmp.ne.s32.totalorder %s112, %s114
      %p121 = scmp.eq.s32.totalorder %s22, 1
      %p122 = por %p120, %p121
      %p123 = scmp.ne.s32.totalorder %s114, %s115
      %p124 = scmp.eq.s32.totalorder %s22, 0
      %p125 = por %p123, %p124
      %p126 = scmp.ne.s32.totalorder %s114, %s115
      %p127 = scmp.eq.s32.totalorder %s23, 1
      %p128 = por %p126, %p127
      %p130 = scmp.ne.s32.totalorder %s115, %s129
      %p131 = scmp.eq.s32.totalorder %s23, 0
      %p132 = por %p130, %p131
      %s133 = ssub.s32 %s24, %s36
      %p134 = scmp.eq.s32.totalorder %s133, 0
      %s136 = sadd.s32 %s135, 1
      %s137 = scalar_select %p134, %s135, %s136
      %p140 = pneg %p134
      %p141 = scmp.eq.s32.totalorder %s17, 1
      %p142 = por %p140, %p141
      %p143 = scmp.ne.s32.totalorder %s135, %s138
      %p144 = scmp.eq.s32.totalorder %s17, 0
      %p145 = por %p143, %p144
      %p146 = scmp.ne.s32.totalorder %s135, %s138
      %p147 = scmp.eq.s32.totalorder %s22, 1
      %p148 = por %p146, %p147
      %p149 = scmp.ne.s32.totalorder %s138, %s139
      %p150 = scmp.eq.s32.totalorder %s22, 0
      %p151 = por %p149, %p150
      %p152 = scmp.ne.s32.totalorder %s138, %s139
      %p153 = scmp.eq.s32.totalorder %s23, 1
      %p154 = por %p152, %p153
      %p156 = scmp.ne.s32.totalorder %s139, %s155
      %p157 = scmp.eq.s32.totalorder %s23, 0
      %p158 = por %p156, %p157
      %p159 = scmp.le.s32.totalorder 1, %s17
      %p160 = scmp.lt.s32.totalorder %s17, 3
      %p161 = pnand %p159, %p160
      %p162 = pneg %p161
      // Predicated region
      $region9: #{tpu_custom_call.1} parent=5 // pred_check
        _
      $region10: #{tpu_custom_call.1} parent=5 // pred_check_branch
        %164 = sbr.rel (%p161) target = $region12
      $region11: #{tpu_custom_call.1} parent=5 // pred_region
        %s165 = ssub.s32 %s17, 1
        // Predicated region
        $region13: #{tpu_custom_call.1} parent=11 // pred_check
          %p166 = pneg %p83
        $region14: #{tpu_custom_call.1} parent=11 // pred_check_branch
          %168 = sbr.rel (%p166) target = $region16
        $region15: #{tpu_custom_call.1} parent=11 // pred_region
          %s169 = smul.u32 16, %s27
          %s171 = ssub.s32 1024, 1024
          %172 = vsyncadd [#allocation7], %s171
          %s173 = smul.addr %s169, 64
          %s174 = scalar_lea.hbm %s1, %s173
          %s175 = sshll.u32 [#allocation6], 4
          %s176 = int_to_ptr.vmem [resolvable:$true] %s175
          %181 = dma.hbm_to_vmem [thread:$0]  %s174, 1024, %s176, [#allocation7], 64, 64, 4
        $region16: #{tpu_custom_call.1} parent=11 // pred_fallthru
          _
        // Predicated region
        $region17: #{tpu_custom_call.1} parent=11 // pred_check
          %p182 = pneg %p104
        $region18: #{tpu_custom_call.1} parent=11 // pred_check_branch
          %184 = sbr.rel (%p182) target = $region20
        $region19: #{tpu_custom_call.1} parent=11 // pred_region
          _
        $region20: #{tpu_custom_call.1} parent=11 // pred_fallthru
          _
        // Predicated region
        $region21: #{tpu_custom_call.1} parent=11 // pred_check
          %p185 = pneg %p125
        $region22: #{tpu_custom_call.1} parent=11 // pred_check_branch
          %187 = sbr.rel (%p185) target = $region24
        $region23: #{tpu_custom_call.1} parent=11 // pred_region
          _
        $region24: #{tpu_custom_call.1} parent=11 // pred_fallthru
          _
      $region12: #{tpu_custom_call.1} parent=5 // pred_fallthru
        _
      %p188 = scmp.lt.s32.totalorder %s17, 2
      // Predicated region
      $region25: #{tpu_custom_call.1} parent=5 // pred_check
        %p189 = pneg %p188
      $region26: #{tpu_custom_call.1} parent=5 // pred_check_branch
        %191 = sbr.rel (%p189) target = $region28
      $region27: #{tpu_custom_call.1} parent=5 // pred_region
        // Predicated region
        $region29: #{tpu_custom_call.1} parent=27 // pred_check
          %p192 = pneg %p51
        $region30: #{tpu_custom_call.1} parent=27 // pred_check_branch
          %194 = sbr.rel (%p192) target = $region32
        $region31: #{tpu_custom_call.1} parent=27 // pred_region
          %s195 = sand.u32 %s41, 1
          %s196 = scalar_lea.sflag [#allocation4], %s195
          %s197 = sand.u32 %s41, 1
          %s198 = smul.addr %s197, 32
          %s199 = scalar_lea.vmem [#allocation3], %s198
          %s200 = smul.u32 8, %s24
          %s202 = ssub.s32 512, 512
          %203 = vsyncadd %s196, %s202
          %s204 = sadd.s32 %s25, %s200
          %s205 = smul.addr %s204, 64
          %s206 = scalar_lea.hbm %s0, %s205
          %s207 = sshll.u32 %s199, 4
          %s208 = int_to_ptr.vmem [resolvable:$true] %s207
          %213 = dma.hbm_to_vmem [thread:$0]  %s206, 512, %s208, %s196, 64, 64, 4
        $region32: #{tpu_custom_call.1} parent=27 // pred_fallthru
          _
      $region28: #{tpu_custom_call.1} parent=5 // pred_fallthru
        _
      %p214 = scmp.le.s32.totalorder 1, %s17
      %p215 = scmp.lt.s32.totalorder %s17, 3
      %p216 = pnand %p214, %p215
      %p217 = pneg %p216
      // Predicated region
      $region33: #{tpu_custom_call.1} parent=5 // pred_check
        _
      $region34: #{tpu_custom_call.1} parent=5 // pred_check_branch
        %219 = sbr.rel (%p216) target = $region36
      $region35: #{tpu_custom_call.1} parent=5 // pred_region
        %s220 = ssub.s32 %s17, 1
        %s221 = sand.u32 %s44, 1
        %s222 = scalar_lea.sflag [#allocation4], %s221
        %s223 = sand.u32 %s44, 1
        %s224 = smul.addr %s223, 32
        %s225 = scalar_lea.vmem [#allocation3], %s224
        // Predicated region
        $region37: #{tpu_custom_call.1} parent=35 // pred_check
          %p226 = pneg %p57
        $region38: #{tpu_custom_call.1} parent=35 // pred_check_branch
          %228 = sbr.rel (%p226) target = $region40
        $region39: #{tpu_custom_call.1} parent=35 // pred_region
          %229 = dma.done %s222, 512
        $region40: #{tpu_custom_call.1} parent=35 // pred_fallthru
          _
        // Predicated region
        $region41: #{tpu_custom_call.1} parent=35 // pred_check
          %p230 = pneg %p83
        $region42: #{tpu_custom_call.1} parent=35 // pred_check_branch
          %232 = sbr.rel (%p230) target = $region44
        $region43: #{tpu_custom_call.1} parent=35 // pred_region
          %233 = dma.done [#allocation7], 1024
        $region44: #{tpu_custom_call.1} parent=35 // pred_fallthru
          _
        %s234 = sand.u32 %s44, 1
        %s235 = scalar_lea.sflag [#allocation4], %s234
        %s236 = sand.u32 %s44, 1
        %s237 = smul.addr %s236, 32
        %s238 = scalar_lea.vmem [#allocation3], %s237
        %p239 = pneg %p57
        %p240 = pneg %p54
        %p241 = pneg %p83
        %p242 = pneg %p80
        %p243 = pneg %p104
        %p244 = pneg %p101
        %p245 = pneg %p125
        %p246 = pneg %p122
        %p247 = pneg %p151
        %p248 = pneg %p148
        %s249 = sand.u32 %s138, 1
        %s250 = scalar_lea.sflag [#allocation5], %s249
        %s251 = sand.u32 %s138, 1
        %s252 = smul.addr %s251, 32
        %s253 = scalar_lea.vmem [#allocation8], %s252
        %s254 = smul.u32 8, %s26
        %s255 = smul.u32 16, %s27
        %s256 = smul.u32 8, %s26
        %p258 = scmp.eq.s32.totalorder %s27, 0
        // Predicated region
        $region45: #{tpu_custom_call.1} parent=35 // pred_check
          %p259 = pneg %p258
        $region46: #{tpu_custom_call.1} parent=35 // pred_check_branch
          %261 = sbr.rel (%p259) target = $region48
        $region47: #{tpu_custom_call.1} parent=35 // pred_region
          %262 = vst [vmem:[#allocation2] sm:$0xff] 0.0
          %263 = vst [vmem:[#allocation2 + $0x8] sm:$0xff] 0.0
          %264 = vst [vmem:[#allocation2 + $0x10] sm:$0xff] 0.0
          %265 = vst [vmem:[#allocation2 + $0x18] sm:$0xff] 0.0
          %266 = vst [vmem:[#allocation2 + $0x20] sm:$0xff] 0.0
          %267 = vst [vmem:[#allocation2 + $0x28] sm:$0xff] 0.0
          %268 = vst [vmem:[#allocation2 + $0x30] sm:$0xff] 0.0
          %269 = vst [vmem:[#allocation2 + $0x38] sm:$0xff] 0.0
        $region48: #{tpu_custom_call.1} parent=35 // pred_fallthru
          _
        %v270 = vld [vmem:[#allocation2] sm:$0xff]
        %v271 = vld [vmem:[#allocation2 + $0x8] sm:$0xff]
        %v272 = vld [vmem:[#allocation2 + $0x10] sm:$0xff]
        %v273 = vld [vmem:[#allocation2 + $0x18] sm:$0xff]
        %v274 = vld [vmem:[#allocation2 + $0x20] sm:$0xff]
        %v275 = vld [vmem:[#allocation2 + $0x28] sm:$0xff]
        %v276 = vld [vmem:[#allocation2 + $0x30] sm:$0xff]
        %v277 = vld [vmem:[#allocation2 + $0x38] sm:$0xff]
        %v278 = vld [vmem:[%s225] sm:$0xf]
        %v279 = vld [vmem:[%s225 + $0x4] sm:$0xf]
        %v280 = vld [vmem:[%s225 + $0x8] sm:$0xf]
        %v281 = vld [vmem:[%s225 + $0xc] sm:$0xf]
        %v282 = vld [vmem:[%s225 + $0x10] sm:$0xf]
        %v283 = vld [vmem:[%s225 + $0x14] sm:$0xf]
        %v284 = vld [vmem:[%s225 + $0x18] sm:$0xf]
        %v285 = vld [vmem:[%s225 + $0x1c] sm:$0xf]
        %v286 = vld [vmem:[#allocation6] sm:$0xf]
        %v287 = vld [vmem:[#allocation6 + $0x4] sm:$0xf]
        %v288 = vld [vmem:[#allocation6 + $0x8] sm:$0xf]
        %v289 = vld [vmem:[#allocation6 + $0xc] sm:$0xf]
        %v290 = vld [vmem:[#allocation6 + $0x10] sm:$0xf]
        %v291 = vld [vmem:[#allocation6 + $0x14] sm:$0xf]
        %v292 = vld [vmem:[#allocation6 + $0x18] sm:$0xf]
        %v293 = vld [vmem:[#allocation6 + $0x1c] sm:$0xf]
        %v294 = vld [vmem:[#allocation6 + $0x20] sm:$0xf]
        %v295 = vld [vmem:[#allocation6 + $0x24] sm:$0xf]
        %v296 = vld [vmem:[#allocation6 + $0x28] sm:$0xf]
        %v297 = vld [vmem:[#allocation6 + $0x2c] sm:$0xf]
        %v298 = vld [vmem:[#allocation6 + $0x30] sm:$0xf]
        %v299 = vld [vmem:[#allocation6 + $0x34] sm:$0xf]
        %v300 = vld [vmem:[#allocation6 + $0x38] sm:$0xf]
        %v301 = vld [vmem:[#allocation6 + $0x3c] sm:$0xf]
        %v310 = vunpack.c.l.b16 %v278
        %v311 = vunpack.c.l.b16 %v279
        %v312 = vunpack.c.l.b16 %v280
        %v313 = vunpack.c.l.b16 %v281
        %v314 = vunpack.c.l.b16 %v282
        %v315 = vunpack.c.l.b16 %v283
        %v316 = vunpack.c.l.b16 %v284
        %v317 = vunpack.c.l.b16 %v285
        %v318 = vpack.c.b16 %v311, %v310
        %v319 = vpack.c.b16 %v313, %v312
        %v320 = vpack.c.b16 %v315, %v314
        %v321 = vpack.c.b16 %v317, %v316
        %v342 = vunpack.c.l.b16 %v286
        %v343 = vunpack.c.l.b16 %v287
        %v344 = vunpack.c.l.b16 %v288
        %v345 = vunpack.c.l.b16 %v289
        %v346 = vunpack.c.l.b16 %v290
        %v347 = vunpack.c.l.b16 %v291
        %v348 = vunpack.c.l.b16 %v292
        %v349 = vunpack.c.l.b16 %v293
        %v350 = vunpack.c.l.b16 %v294
        %v351 = vunpack.c.l.b16 %v295
        %v352 = vunpack.c.l.b16 %v296
        %v353 = vunpack.c.l.b16 %v297
        %v354 = vunpack.c.l.b16 %v298
        %v355 = vunpack.c.l.b16 %v299
        %v356 = vunpack.c.l.b16 %v300
        %v357 = vunpack.c.l.b16 %v301
        %v358 = vpack.c.b16 %v343, %v342
        %v359 = vpack.c.b16 %v345, %v344
        %v360 = vpack.c.b16 %v347, %v346
        %v361 = vpack.c.b16 %v349, %v348
        %v362 = vpack.c.b16 %v351, %v350
        %v363 = vpack.c.b16 %v353, %v352
        %v364 = vpack.c.b16 %v355, %v354
        %v365 = vpack.c.b16 %v357, %v356
        %374 = vmatprep.subr.bf16.mxu0 0
        %375 = vmatpush1.bf16.msra.mxu0 %v365
        %376 = vmatprep.subr.bf16.mxu0 0
        %377 = vmatpush1.bf16.msra.mxu0 %v364
        %378 = vmatprep.subr.bf16.mxu0 0
        %379 = vmatpush1.bf16.msra.mxu0 %v363
        %380 = vmatprep.subr.bf16.mxu0 0
        %381 = vmatpush1.bf16.msra.mxu0 %v362
        %382 = vmatprep.subr.bf16.mxu0 0
        %383 = vmatpush1.bf16.msra.mxu0 %v361
        %384 = vmatprep.subr.bf16.mxu0 0
        %385 = vmatpush1.bf16.msra.mxu0 %v360
        %386 = vmatprep.subr.bf16.mxu0 0
        %387 = vmatpush1.bf16.msra.mxu0 %v359
        %388 = vmatprep.subr.bf16.mxu0 0
        %389 = vmatpush1.bf16.msra.mxu0 %v358
        %390 = vmatprep.subr.bf16.mxu0 0
        %391 = vmatpush2.bf16.msra.mxu0 0
        %392 = vmatprep.subr.bf16.mxu0 0
        %393 = vmatpush2.bf16.msra.mxu0 0
        %394 = vmatprep.subr.bf16.mxu0 0
        %395 = vmatpush2.bf16.msra.mxu0 0
        %396 = vmatprep.subr.bf16.mxu0 0
        %397 = vmatpush2.bf16.msra.mxu0 0
        %398 = vmatprep.subr.bf16.mxu0 0
        %399 = vmatpush2.bf16.msra.mxu0 0
        %400 = vmatprep.subr.bf16.mxu0 0
        %401 = vmatpush2.bf16.msra.mxu0 0
        %402 = vmatprep.subr.bf16.mxu0 0
        %403 = vmatpush2.bf16.msra.mxu0 0
        %404 = vmatprep.subr.bf16.mxu0 0
        %405 = vmatpush2.bf16.msra.mxu0 0
        %406 = vmatprep.mubr.bf16.mxu0 0
        %407 = vmatmul.mubr.bf16.gmra.mxu0 %v318
        %v408 = vpop.f32.mrf.mxu0
        %v409 = vadd.f32 0.0, %v408
        %v410 = vpop.f32.mrf.mxu0
        %v411 = vpop.f32.mrf.mxu0
        %v412 = vadd.f32 0.0, %v411
        %v413 = vpop.f32.mrf.mxu0
        %414 = vmatprep.mubr.bf16.mxu0 0
        %415 = vmatmul.mubr.bf16.gmra.mxu0 %v319
        %v416 = vpop.f32.mrf.mxu0
        %v417 = vadd.f32 0.0, %v416
        %v418 = vpop.f32.mrf.mxu0
        %v419 = vpop.f32.mrf.mxu0
        %v420 = vadd.f32 0.0, %v419
        %v421 = vpop.f32.mrf.mxu0
        %422 = vmatprep.mubr.bf16.mxu0 0
        %423 = vmatmul.mubr.bf16.gmra.mxu0 %v320
        %v424 = vpop.f32.mrf.mxu0
        %v425 = vadd.f32 0.0, %v424
        %v426 = vpop.f32.mrf.mxu0
        %v427 = vpop.f32.mrf.mxu0
        %v428 = vadd.f32 0.0, %v427
        %v429 = vpop.f32.mrf.mxu0
        %430 = vmatprep.mubr.bf16.mxu0 0
        %431 = vmatmul.mubr.bf16.gmra.mxu0 %v321
        %v432 = vpop.f32.mrf.mxu0
        %v433 = vadd.f32 0.0, %v432
        %v434 = vpop.f32.mrf.mxu0
        %v435 = vpop.f32.mrf.mxu0
        %v436 = vadd.f32 0.0, %v435
        %v437 = vpop.f32.mrf.mxu0
        %438 = vdwg.mxu0
        %v439 = vadd.f32 %v270, %v409
        %v440 = vadd.f32 %v271, %v412
        %v441 = vadd.f32 %v272, %v417
        %v442 = vadd.f32 %v273, %v420
        %v443 = vadd.f32 %v274, %v425
        %v444 = vadd.f32 %v275, %v428
        %v445 = vadd.f32 %v276, %v433
        %v446 = vadd.f32 %v277, %v436
        %447 = vst [vmem:[#allocation2] sm:$0xff] %v439
        %448 = vst [vmem:[#allocation2 + $0x8] sm:$0xff] %v440
        %449 = vst [vmem:[#allocation2 + $0x10] sm:$0xff] %v441
        %450 = vst [vmem:[#allocation2 + $0x18] sm:$0xff] %v442
        %451 = vst [vmem:[#allocation2 + $0x20] sm:$0xff] %v443
        %452 = vst [vmem:[#allocation2 + $0x28] sm:$0xff] %v444
        %453 = vst [vmem:[#allocation2 + $0x30] sm:$0xff] %v445
        %454 = vst [vmem:[#allocation2 + $0x38] sm:$0xff] %v446
        // Predicated region
        $region49: #{tpu_custom_call.1} parent=35 // pred_check
          %p455 = pneg %p258
        $region50: #{tpu_custom_call.1} parent=35 // pred_check_branch
          %457 = sbr.rel (%p455) target = $region52
        $region51: #{tpu_custom_call.1} parent=35 // pred_region
          %v458 = vld [vmem:[#allocation2] sm:$0xff]
          %v459 = vld [vmem:[#allocation2 + $0x8] sm:$0xff]
          %v460 = vld [vmem:[#allocation2 + $0x10] sm:$0xff]
          %v461 = vld [vmem:[#allocation2 + $0x18] sm:$0xff]
          %v462 = vld [vmem:[#allocation2 + $0x20] sm:$0xff]
          %v463 = vld [vmem:[#allocation2 + $0x28] sm:$0xff]
          %v464 = vld [vmem:[#allocation2 + $0x30] sm:$0xff]
          %v465 = vld [vmem:[#allocation2 + $0x38] sm:$0xff]
          %v466 = vld [vmem:[%s2] sm:$0x1]
          %v468 = vlaneseq
          %v469 = vshrl.u32 %v468, 7
          %v470 = vsub.s32 0, %v469
          %v471 = vrot.slane %v466, %v470
          %v473 = vmul.f32 %v458, %v471
          %v474 = vmul.f32 %v459, %v471
          %v475 = vmul.f32 %v460, %v471
          %v476 = vmul.f32 %v461, %v471
          %v477 = vmul.f32 %v462, %v471
          %v478 = vmul.f32 %v463, %v471
          %v479 = vmul.f32 %v464, %v471
          %v480 = vmul.f32 %v465, %v471
          %v481 = vld [vmem:[%s3] sm:$0x1]
          %v483 = vlaneseq
          %v484 = vshrl.u32 %v483, 7
          %v485 = vsub.s32 0, %v484
          %v486 = vrot.slane %v481, %v485
          %v488 = vadd.f32 %v473, %v486
          %v489 = vadd.f32 %v474, %v486
          %v490 = vadd.f32 %v475, %v486
          %v491 = vadd.f32 %v476, %v486
          %v492 = vadd.f32 %v477, %v486
          %v493 = vadd.f32 %v478, %v486
          %v494 = vadd.f32 %v479, %v486
          %v495 = vadd.f32 %v480, %v486
          %v496 = vmax.f32 %v488, 0.0
          %v497 = vmax.f32 %v489, 0.0
          %v498 = vmax.f32 %v490, 0.0
          %v499 = vmax.f32 %v491, 0.0
          %v500 = vmax.f32 %v492, 0.0
          %v501 = vmax.f32 %v493, 0.0
          %v502 = vmax.f32 %v494, 0.0
          %v503 = vmax.f32 %v495, 0.0
          %v504 = vpack.c.bf16 %v497, %v496
          %v505 = vpack.c.bf16 %v499, %v498
          %v506 = vpack.c.bf16 %v501, %v500
          %v507 = vpack.c.bf16 %v503, %v502
          %v512 = vunpack.c.l.b16 %v504
          %v513 = vunpack.c.h.b16 %v504
          %v514 = vunpack.c.l.b16 %v505
          %v515 = vunpack.c.h.b16 %v505
          %v516 = vunpack.c.l.b16 %v506
          %v517 = vunpack.c.h.b16 %v506
          %v518 = vunpack.c.l.b16 %v507
          %v519 = vunpack.c.h.b16 %v507
          %v520 = vpack.c.b16 %v512, %v512
          %v521 = vpack.c.b16 %v513, %v513
          %v522 = vpack.c.b16 %v514, %v514
          %v523 = vpack.c.b16 %v515, %v515
          %v524 = vpack.c.b16 %v516, %v516
          %v525 = vpack.c.b16 %v517, %v517
          %v526 = vpack.c.b16 %v518, %v518
          %v527 = vpack.c.b16 %v519, %v519
          %536 = vst [vmem:[%s253] sm:$0xf] %v520
          %537 = vst [vmem:[%s253 + $0x4] sm:$0xf] %v521
          %538 = vst [vmem:[%s253 + $0x8] sm:$0xf] %v522
          %539 = vst [vmem:[%s253 + $0xc] sm:$0xf] %v523
          %540 = vst [vmem:[%s253 + $0x10] sm:$0xf] %v524
          %541 = vst [vmem:[%s253 + $0x14] sm:$0xf] %v525
          %542 = vst [vmem:[%s253 + $0x18] sm:$0xf] %v526
          %543 = vst [vmem:[%s253 + $0x1c] sm:$0xf] %v527
        $region52: #{tpu_custom_call.1} parent=35 // pred_fallthru
          _
        %s544 = sand.u32 %s138, 1
        %s545 = scalar_lea.sflag [#allocation5], %s544
        %s546 = sand.u32 %s138, 1
        %s547 = smul.addr %s546, 32
        %s548 = scalar_lea.vmem [#allocation8], %s547
        // Predicated region
        $region53: #{tpu_custom_call.1} parent=35 // pred_check
          %p549 = pneg %p148
        $region54: #{tpu_custom_call.1} parent=35 // pred_check_branch
          %551 = sbr.rel (%p549) target = $region56
        $region55: #{tpu_custom_call.1} parent=35 // pred_region
          %s552 = smul.u32 8, %s26
          %s554 = ssub.s32 512, 512
          %555 = vsyncadd %s545, %s554
          %s556 = smul.addr %s552, 64
          %s557 = scalar_lea.hbm %s4, %s556
          %s558 = sshll.u32 %s548, 4
          %s559 = int_to_ptr.vmem [resolvable:$true] %s558
          %564 = dma.vmem_to_hbm [thread:$0]  %s559, 512, %s557, %s545, 64, 64, 4
        $region56: #{tpu_custom_call.1} parent=35 // pred_fallthru
          _
      $region36: #{tpu_custom_call.1} parent=5 // pred_fallthru
        _
      %p565 = scmp.le.s32.totalorder 2, %s17
      // Predicated region
      $region57: #{tpu_custom_call.1} parent=5 // pred_check
        %p566 = pneg %p565
      $region58: #{tpu_custom_call.1} parent=5 // pred_check_branch
        %568 = sbr.rel (%p566) target = $region60
      $region59: #{tpu_custom_call.1} parent=5 // pred_region
        %s569 = ssub.s32 %s17, 2
        // Predicated region
        $region61: #{tpu_custom_call.1} parent=59 // pred_check
          %p570 = pneg %p154
        $region62: #{tpu_custom_call.1} parent=59 // pred_check_branch
          %572 = sbr.rel (%p570) target = $region64
        $region63: #{tpu_custom_call.1} parent=59 // pred_region
          %s573 = sand.u32 %s139, 1
          %s574 = scalar_lea.sflag [#allocation5], %s573
          %s575 = sand.u32 %s139, 1
          %s576 = smul.addr %s575, 32
          %s577 = scalar_lea.vmem [#allocation8], %s576
          %578 = dma.done %s574, 512
        $region64: #{tpu_custom_call.1} parent=59 // pred_fallthru
          _
      $region60: #{tpu_custom_call.1} parent=5 // pred_fallthru
        _
    $region6: #{tpu_custom_call.1} parent=1 // loop_footer
      %s21 = sadd.s32 1, %s17
    $region7: #{tpu_custom_call.1} parent=1 // loop_footer_branch
      %16 = sbr.rel target = $region3
    $region8: #{tpu_custom_call.1} parent=1 // loop_exit
      _
    %579 = vsyncpa [#allocation4], 1
    %s580 = scalar_lea.sflag [#allocation4], 1
    %581 = vsyncpa %s580, 1
    %582 = vsyncpa [#allocation7], 1
    %583 = vsyncpa [#allocation5], 1
    %s584 = scalar_lea.sflag [#allocation5], 1
    %585 = vsyncpa %s584, 1

</llo_original>
